<compile_context>
chip_gen: v7x
topology: tpu7x:2x2x1
jax: 0.10.0
libtpu: 0.0.40
codegen_flags: <defaults>
</compile_context>

<pallas_src>
import functools

import jax
import jax.numpy as jnp
from jax.experimental import pallas as pl
from jax.experimental.pallas import tpu as pltpu


def _leaky_relu(v, slope=0.2):
    return jnp.where(v > 0, v, slope * v)


def mlp_kernel(x_ref, w1_ref, b1_ref, w2_ref, b2_ref, w3_ref, b3_ref,
               w4_ref, b4_ref, out_ref, *, tb, n_nodes, readout):
    # x_ref:   (tb * n_nodes, input_dim)  — one streamed tile of whole graphs (bf16)
    # w*/b*:   resident weight/bias blocks (w1 bf16, rest f32)
    # out_ref: (tb, 2) f32
    x = x_ref[...]

    # fc1 (bf16 x bf16 on the MXU, f32 accumulate) + leaky_relu in f32
    h = jnp.dot(x, w1_ref[...], preferred_element_type=jnp.float32) + b1_ref[...]
    h = _leaky_relu(h)
    # fc2 + leaky_relu
    h = jnp.dot(h, w2_ref[...], preferred_element_type=jnp.float32) + b2_ref[...]
    h = _leaky_relu(h)                                        # (tb*n_nodes, 8) f32

    # Graph readout over the n_nodes of each graph in this tile: cheap in-kernel
    # reduction (no dense pooling matmul, no extra resident VMEM block).
    # TODO(synk): if n_nodes is not a multiple of 8 this reshape needs a sublane
    # relayout; fine correctness-wise, minor cost on a mem-bound kernel.
    h3 = h.reshape(tb, n_nodes, 8)
    if readout == "mean":
        pooled = jnp.sum(h3, axis=1) * (1.0 / n_nodes)
    elif readout == "sum":
        pooled = jnp.sum(h3, axis=1)
    elif readout == "max":
        pooled = jnp.max(h3, axis=1)
    else:
        raise ValueError(f"unknown readout: {readout}")

    # lin1 + leaky_relu
    g = jnp.dot(pooled, w3_ref[...], preferred_element_type=jnp.float32) + b3_ref[...]
    g = _leaky_relu(g)
    # dropout(p=0.5) is identity in eval mode.
    # TODO(synk): training-mode dropout would need pltpu.prng_seed / prng_random_bits.
    out_ref[...] = (jnp.dot(g, w4_ref[...], preferred_element_type=jnp.float32)
                    + b4_ref[...])


def _choose_graph_tile(batch_size, n_nodes, target_rows=4096):
    """Pick tb = graphs per grid step.

    Constraints (TPU (8,128) block rule, applied to the second-to-last dims):
      * tb divides batch_size,
      * tb*n_nodes (x-block sublane dim) is a multiple of 8,
      * tb (out-block sublane dim) is a multiple of 8,
    all exempt when the block covers the whole array.  Prefer >= 2 grid steps
    so v7x's two TensorCores both get work.
    """
    max_tb = max(1, target_rows // max(1, n_nodes))
    if batch_size >= 2:
        max_tb = min(max_tb, batch_size // 2)  # keep at least 2 grid steps
    for tb in range(min(max_tb, batch_size), 0, -1):
        if batch_size % tb == 0 and tb % 8 == 0 and (tb * n_nodes) % 8 == 0:
            return tb
    # TODO(synk): batch sizes with no multiple-of-8 divisor fall back to a single
    # whole-batch block; for very large N this should pad the batch instead.
    return batch_size


def mlp_forward(x, params, batch_size, readout="mean", use_bf16=True,
                target_rows=4096):
    """x: [N, input_dim] float32; params: dict of transposed weights/biases."""
    N, input_dim = x.shape
    assert N % batch_size == 0, "x rows must be batch_size * n_nodes"
    n_nodes = N // batch_size

    tb = _choose_graph_tile(batch_size, n_nodes, target_rows)
    rows = tb * n_nodes
    grid = (batch_size // tb,)

    w1 = params["w1"]
    if use_bf16:
        # Halve the dominant HBM stream (x) and feed the MXU its native dtype;
        # accumulation and all post-matmul math stay f32 inside the kernel.
        x = x.astype(jnp.bfloat16)
        w1 = w1.astype(jnp.bfloat16)
    b1 = params["b1"]
    w2, b2 = params["w2"], params["b2"]
    w3, b3 = params["w3"], params["b3"]
    w4, b4 = params["w4"], params["b4"]

    # Resident (constant index_map) blocks: never re-DMA'd across grid steps.
    resident = lambda a: pl.BlockSpec(a.shape, lambda i: (0,) * a.ndim)

    kernel = functools.partial(mlp_kernel, tb=tb, n_nodes=n_nodes, readout=readout)

    return pl.pallas_call(
        kernel,
        out_shape=jax.ShapeDtypeStruct((batch_size, 2), jnp.float32),
        grid=grid,
        in_specs=[
            pl.BlockSpec((rows, input_dim), lambda i: (i, 0)),   # streamed x tile
            resident(w1), resident(b1),
            resident(w2), resident(b2),
            resident(w3), resident(b3),
            resident(w4), resident(b4),
        ],
        out_specs=pl.BlockSpec((tb, 2), lambda i: (i, 0)),
        compiler_params=pltpu.CompilerParams(
            dimension_semantics=("parallel",),
            vmem_limit_bytes=32 * 1024 * 1024,
        ),
    )(x, w1, b1, w2, b2, w3, b3, w4, b4)


def init_params(key, input_dim=384, hidden_dim=32):
    """Deterministic init. PyTorch Linear weight is (out,in); store transposed (in,out)."""
    ks = jax.random.split(key, 8)

    def lin(kw, kb, fan_in, fan_out):
        bound = 1.0 / jnp.sqrt(fan_in)
        w = jax.random.uniform(kw, (fan_in, fan_out), jnp.float32, -bound, bound)
        b = jax.random.uniform(kb, (1, fan_out), jnp.float32, -bound, bound)
        return w, b

    w1, b1 = lin(ks[0], ks[1], input_dim, hidden_dim)
    w2, b2 = lin(ks[2], ks[3], hidden_dim, 8)
    w3, b3 = lin(ks[4], ks[5], 8, 8)
    w4, b4 = lin(ks[6], ks[7], 8, 2)
    return dict(w1=w1, b1=b1, w2=w2, b2=b2, w3=w3, b3=b3, w4=w4, b4=b4)


def mlp_reference(x, params, batch_size):
    """Full-f32 reference matching the PyTorch module (eval mode, mean readout)."""
    h = _leaky_relu(x @ params["w1"] + params["b1"])
    h = _leaky_relu(h @ params["w2"] + params["b2"])
    h = h.reshape(batch_size, -1, 8).mean(axis=1)
    g = _leaky_relu(h @ params["w3"] + params["b3"])
    return g @ params["w4"] + params["b4"]


if __name__ == "__main__":
    key = jax.random.PRNGKey(0)
    k_params, k_x1, k_x2 = jax.random.split(key, 3)

    input_dim, hidden_dim = 384, 32
    params = init_params(k_params, input_dim, hidden_dim)

    # Small case (matches the module's tiny-graph usage): single grid step.
    batch_size, n_nodes = 2, 8
    x = jax.random.normal(k_x1, (batch_size * n_nodes, input_dim), jnp.float32)
    out = jax.block_until_ready(mlp_forward(x, params, batch_size))
    ref = mlp_reference(x, params, batch_size)
    assert out.shape == (batch_size, 2)
    # bf16 x/w1 streaming with f32 accumulation => loosened tolerance vs f32 ref.
    assert jnp.allclose(out, ref, atol=2e-2, rtol=2e-2), (out, ref)

    # Larger case: exercises the multi-step pipelined grid (2 parallel steps).
    batch_size2, n_nodes2 = 32, 16
    x2 = jax.random.normal(k_x2, (batch_size2 * n_nodes2, input_dim), jnp.float32)
    out2 = jax.block_until_ready(mlp_forward(x2, params, batch_size2))
    ref2 = mlp_reference(x2, params, batch_size2)
    assert out2.shape == (batch_size2, 2)
    assert jnp.allclose(out2, ref2, atol=2e-2, rtol=2e-2), (out2, ref2)

    print("KERNEL_OK")
</pallas_src>

<mosaic_0001>
module attributes {stable_mosaic.version = 11 : i64} {
  func.func @mlp_kernel(%arg0: i32, %arg1: memref<16x384xbf16, #tpu.memory_space<vmem>>, %arg2: memref<384x32xbf16, #tpu.memory_space<vmem>>, %arg3: memref<1x32xf32, #tpu.memory_space<vmem>>, %arg4: memref<32x8xf32, #tpu.memory_space<vmem>>, %arg5: memref<1x8xf32, #tpu.memory_space<vmem>>, %arg6: memref<8x8xf32, #tpu.memory_space<vmem>>, %arg7: memref<1x8xf32, #tpu.memory_space<vmem>>, %arg8: memref<8x2xf32, #tpu.memory_space<vmem>>, %arg9: memref<1x2xf32, #tpu.memory_space<vmem>>, %arg10: memref<2x2xf32, #tpu.memory_space<vmem>>) attributes {dimension_semantics = [#tpu.dimension_semantics<parallel>], iteration_bounds = array<i64: 1>, scalar_prefetch = 0 : i64, scratch_operands = 0 : i64, tpu.core_type = #tpu.core_type<tc>, window_params = [{transform_indices = @transform_0, window_bounds = array<i64: 16, 384>}, {pipeline_mode = #tpu.pipeline_mode<synchronous>, transform_indices = @transform_1, window_bounds = array<i64: 384, 32>}, {pipeline_mode = #tpu.pipeline_mode<synchronous>, transform_indices = @transform_2, window_bounds = array<i64: 1, 32>}, {pipeline_mode = #tpu.pipeline_mode<synchronous>, transform_indices = @transform_3, window_bounds = array<i64: 32, 8>}, {pipeline_mode = #tpu.pipeline_mode<synchronous>, transform_indices = @transform_4, window_bounds = array<i64: 1, 8>}, {pipeline_mode = #tpu.pipeline_mode<synchronous>, transform_indices = @transform_5, window_bounds = array<i64: 8, 8>}, {pipeline_mode = #tpu.pipeline_mode<synchronous>, transform_indices = @transform_6, window_bounds = array<i64: 1, 8>}, {pipeline_mode = #tpu.pipeline_mode<synchronous>, transform_indices = @transform_7, window_bounds = array<i64: 8, 2>}, {pipeline_mode = #tpu.pipeline_mode<synchronous>, transform_indices = @transform_8, window_bounds = array<i64: 1, 2>}, {transform_indices = @transform_9, window_bounds = array<i64: 2, 2>}]} {
    %c0 = arith.constant 0 : index
    %c0_0 = arith.constant 0 : index
    %0 = vector.load %arg1[%c0, %c0_0] : memref<16x384xbf16, #tpu.memory_space<vmem>>, vector<16x384xbf16>
    %c0_1 = arith.constant 0 : index
    %c0_2 = arith.constant 0 : index
    %1 = vector.load %arg2[%c0_1, %c0_2] : memref<384x32xbf16, #tpu.memory_space<vmem>>, vector<384x32xbf16>
    %cst = arith.constant dense<0.000000e+00> : vector<16x32xf32>
    %2 = tpu.matmul %0, %1, %cst {dimension_numbers = #tpu.dot_dimension_numbers<[1], [0], [0], [1], [0, 0, 1, 1], [], []>} : vector<16x384xbf16>, vector<384x32xbf16>, vector<16x32xf32> -> vector<16x32xf32>
    %c0_3 = arith.constant 0 : index
    %c0_4 = arith.constant 0 : index
    %3 = vector.load %arg3[%c0_3, %c0_4] : memref<1x32xf32, #tpu.memory_space<vmem>>, vector<1x32xf32>
    %4 = vector.broadcast %3 : vector<1x32xf32> to vector<16x32xf32>
    %5 = arith.addf %2, %4 : vector<16x32xf32>
    %cst_5 = arith.constant 0.000000e+00 : f32
    %6 = vector.broadcast %cst_5 : f32 to vector<16x32xf32>
    %7 = arith.cmpf ogt, %5, %6 : vector<16x32xf32>
    %cst_6 = arith.constant 2.000000e-01 : f32
    %8 = vector.broadcast %cst_6 : f32 to vector<16x32xf32>
    %9 = arith.mulf %8, %5 : vector<16x32xf32>
    %10 = arith.select %7, %5, %9 : vector<16x32xi1>, vector<16x32xf32>
    %c0_7 = arith.constant 0 : index
    %c0_8 = arith.constant 0 : index
    %11 = vector.load %arg4[%c0_7, %c0_8] : memref<32x8xf32, #tpu.memory_space<vmem>>, vector<32x8xf32>
    %cst_9 = arith.constant dense<0.000000e+00> : vector<16x8xf32>
    %12 = tpu.matmul %10, %11, %cst_9 {dimension_numbers = #tpu.dot_dimension_numbers<[1], [0], [0], [1], [0, 0, 1, 1], [], []>} : vector<16x32xf32>, vector<32x8xf32>, vector<16x8xf32> -> vector<16x8xf32>
    %c0_10 = arith.constant 0 : index
    %c0_11 = arith.constant 0 : index
    %13 = vector.load %arg5[%c0_10, %c0_11] : memref<1x8xf32, #tpu.memory_space<vmem>>, vector<1x8xf32>
    %14 = vector.broadcast %13 : vector<1x8xf32> to vector<16x8xf32>
    %15 = arith.addf %12, %14 : vector<16x8xf32>
    %cst_12 = arith.constant 0.000000e+00 : f32
    %16 = vector.broadcast %cst_12 : f32 to vector<16x8xf32>
    %17 = arith.cmpf ogt, %15, %16 : vector<16x8xf32>
    %cst_13 = arith.constant 2.000000e-01 : f32
    %18 = vector.broadcast %cst_13 : f32 to vector<16x8xf32>
    %19 = arith.mulf %18, %15 : vector<16x8xf32>
    %20 = arith.select %17, %15, %19 : vector<16x8xi1>, vector<16x8xf32>
    %21 = vector.shape_cast %20 : vector<16x8xf32> to vector<2x8x8xf32>
    %cst_14 = arith.constant dense<0.000000e+00> : vector<2x8xf32>
    %22 = vector.multi_reduction <add>, %21, %cst_14 [1] : vector<2x8x8xf32> to vector<2x8xf32>
    %cst_15 = arith.constant 1.250000e-01 : f32
    %23 = vector.broadcast %cst_15 : f32 to vector<2x8xf32>
    %24 = arith.mulf %22, %23 : vector<2x8xf32>
    %c0_16 = arith.constant 0 : index
    %c0_17 = arith.constant 0 : index
    %25 = vector.load %arg6[%c0_16, %c0_17] : memref<8x8xf32, #tpu.memory_space<vmem>>, vector<8x8xf32>
    %cst_18 = arith.constant dense<0.000000e+00> : vector<2x8xf32>
    %26 = tpu.matmul %24, %25, %cst_18 {dimension_numbers = #tpu.dot_dimension_numbers<[1], [0], [0], [1], [0, 0, 1, 1], [], []>} : vector<2x8xf32>, vector<8x8xf32>, vector<2x8xf32> -> vector<2x8xf32>
    %c0_19 = arith.constant 0 : index
    %c0_20 = arith.constant 0 : index
    %27 = vector.load %arg7[%c0_19, %c0_20] : memref<1x8xf32, #tpu.memory_space<vmem>>, vector<1x8xf32>
    %28 = vector.broadcast %27 : vector<1x8xf32> to vector<2x8xf32>
    %29 = arith.addf %26, %28 : vector<2x8xf32>
    %cst_21 = arith.constant 0.000000e+00 : f32
    %30 = vector.broadcast %cst_21 : f32 to vector<2x8xf32>
    %31 = arith.cmpf ogt, %29, %30 : vector<2x8xf32>
    %cst_22 = arith.constant 2.000000e-01 : f32
    %32 = vector.broadcast %cst_22 : f32 to vector<2x8xf32>
    %33 = arith.mulf %32, %29 : vector<2x8xf32>
    %34 = arith.select %31, %29, %33 : vector<2x8xi1>, vector<2x8xf32>
    %c0_23 = arith.constant 0 : index
    %c0_24 = arith.constant 0 : index
    %35 = vector.load %arg8[%c0_23, %c0_24] : memref<8x2xf32, #tpu.memory_space<vmem>>, vector<8x2xf32>
    %cst_25 = arith.constant dense<0.000000e+00> : vector<2x2xf32>
    %36 = tpu.matmul %34, %35, %cst_25 {dimension_numbers = #tpu.dot_dimension_numbers<[1], [0], [0], [1], [0, 0, 1, 1], [], []>} : vector<2x8xf32>, vector<8x2xf32>, vector<2x2xf32> -> vector<2x2xf32>
    %c0_26 = arith.constant 0 : index
    %c0_27 = arith.constant 0 : index
    %37 = vector.load %arg9[%c0_26, %c0_27] : memref<1x2xf32, #tpu.memory_space<vmem>>, vector<1x2xf32>
    %38 = vector.broadcast %37 : vector<1x2xf32> to vector<2x2xf32>
    %39 = arith.addf %36, %38 : vector<2x2xf32>
    %c0_28 = arith.constant 0 : index
    %c0_29 = arith.constant 0 : index
    %40 = vector.load %arg10[%c0_28, %c0_29] : memref<2x2xf32, #tpu.memory_space<vmem>>, vector<2x2xf32>
    tpu.vector_store %arg10[%c0_28, %c0_29], %39 {strides = array<i32>} : memref<2x2xf32, #tpu.memory_space<vmem>>, vector<2x2xf32>,
    return
  }
  func.func @transform_0(%arg0: i32) -> (i32, i32) {
    %c0_i32 = arith.constant 0 : i32
    %c0_i32_0 = arith.constant 0 : i32
    return %arg0, %c0_i32 : i32, i32
  }
  func.func @transform_1(%arg0: i32) -> (i32, i32) {
    %c0_i32 = arith.constant 0 : i32
    %c0_i32_0 = arith.constant 0 : i32
    %c0_i32_1 = arith.constant 0 : i32
    return %c0_i32, %c0_i32_0 : i32, i32
  }
  func.func @transform_2(%arg0: i32) -> (i32, i32) {
    %c0_i32 = arith.constant 0 : i32
    %c0_i32_0 = arith.constant 0 : i32
    %c0_i32_1 = arith.constant 0 : i32
    return %c0_i32, %c0_i32_0 : i32, i32
  }
  func.func @transform_3(%arg0: i32) -> (i32, i32) {
    %c0_i32 = arith.constant 0 : i32
    %c0_i32_0 = arith.constant 0 : i32
    %c0_i32_1 = arith.constant 0 : i32
    return %c0_i32, %c0_i32_0 : i32, i32
  }
  func.func @transform_4(%arg0: i32) -> (i32, i32) {
    %c0_i32 = arith.constant 0 : i32
    %c0_i32_0 = arith.constant 0 : i32
    %c0_i32_1 = arith.constant 0 : i32
    return %c0_i32, %c0_i32_0 : i32, i32
  }
  func.func @transform_5(%arg0: i32) -> (i32, i32) {
    %c0_i32 = arith.constant 0 : i32
    %c0_i32_0 = arith.constant 0 : i32
    %c0_i32_1 = arith.constant 0 : i32
    return %c0_i32, %c0_i32_0 : i32, i32
  }
  func.func @transform_6(%arg0: i32) -> (i32, i32) {
    %c0_i32 = arith.constant 0 : i32
    %c0_i32_0 = arith.constant 0 : i32
    %c0_i32_1 = arith.constant 0 : i32
    return %c0_i32, %c0_i32_0 : i32, i32
  }
  func.func @transform_7(%arg0: i32) -> (i32, i32) {
    %c0_i32 = arith.constant 0 : i32
    %c0_i32_0 = arith.constant 0 : i32
    %c0_i32_1 = arith.constant 0 : i32
    return %c0_i32, %c0_i32_0 : i32, i32
  }
  func.func @transform_8(%arg0: i32) -> (i32, i32) {
    %c0_i32 = arith.constant 0 : i32
    %c0_i32_0 = arith.constant 0 : i32
    %c0_i32_1 = arith.constant 0 : i32
    return %c0_i32, %c0_i32_0 : i32, i32
  }
  func.func @transform_9(%arg0: i32) -> (i32, i32) {
    %c0_i32 = arith.constant 0 : i32
    %c0_i32_0 = arith.constant 0 : i32
    return %arg0, %c0_i32 : i32, i32
  }
}

</mosaic_0001>

<llo_original>
// kernel: tpu_custom_call.1
$region0: #{tpu_custom_call.1}
  #allocation0 [shape = 'u32[]', space=smem, size = 0x4, offset = 0x4, fixed_abs, tag = 'smem constant byte address 0x4 - core index']
  #allocation1 [shape = 'u32[144,128]{1,0:T(1,128)}', space=vmem, size = 0x12000, scoped, tag = 'internal scratch']
  %s0 = inlined_call_operand.vmem [shape: bf16[16,384], index: 0, kind: input, shape index: {}]
  %s1 = inlined_call_operand.vmem [shape: bf16[384,32], index: 1, kind: input, shape index: {}]
  %s2 = inlined_call_operand.vmem [shape: f32[1,32], index: 2, kind: input, shape index: {}]
  %s3 = inlined_call_operand.vmem [shape: f32[32,8], index: 3, kind: input, shape index: {}]
  %s4 = inlined_call_operand.vmem [shape: f32[1,8], index: 4, kind: input, shape index: {}]
  %s5 = inlined_call_operand.vmem [shape: f32[8,8], index: 5, kind: input, shape index: {}]
  %s6 = inlined_call_operand.vmem [shape: f32[1,8], index: 6, kind: input, shape index: {}]
  %s7 = inlined_call_operand.vmem [shape: f32[8,2], index: 7, kind: input, shape index: {}]
  %s8 = inlined_call_operand.vmem [shape: f32[1,2], index: 8, kind: input, shape index: {}]
  %s9 = inlined_call_operand.hbm [shape: f32[2,2], index: 9, kind: output, shape index: {}]
  %s10 = sld [smem:[#allocation0]]
  $region46: #{tpu_custom_call.1} parent=0
    _
  %s12 = ssub.s32 1, %s10
  %s13 = scalar_select 0, %s12, %s10
  $region1: #{tpu_custom_call.1} parent=0
    #allocation2 [shape = 'u8[1024]{0}', space=vmem, size = 0x400, scoped, tag = 'output window, operand 0, single buffered']
    #allocation3 [shape = 's32[1]{0}', space=sflag, size = 0x4, scoped, tag = 'scoped memory for tpu_custom_call.1']
    %14 = vsyncpa [#allocation3], 0
    // Predicated region
    $region2: #{tpu_custom_call.1} parent=1 // pred_check
      _
    $region3: #{tpu_custom_call.1} parent=1 // pred_check_branch
      %16 = sbr.rel (0) target = $region5
    $region4: #{tpu_custom_call.1} parent=1 // pred_region
      _
    $region5: #{tpu_custom_call.1} parent=1 // pred_fallthru
      _
    // Predicated region
    $region6: #{tpu_custom_call.1} parent=1 // pred_check
      _
    $region7: #{tpu_custom_call.1} parent=1 // pred_check_branch
      %18 = sbr.rel (0) target = $region9
    $region8: #{tpu_custom_call.1} parent=1 // pred_region
      _
    $region9: #{tpu_custom_call.1} parent=1 // pred_fallthru
      _
    // Predicated region
    $region10: #{tpu_custom_call.1} parent=1 // pred_check
      _
    $region11: #{tpu_custom_call.1} parent=1 // pred_check_branch
      %20 = sbr.rel (0) target = $region13
    $region12: #{tpu_custom_call.1} parent=1 // pred_region
      _
    $region13: #{tpu_custom_call.1} parent=1 // pred_fallthru
      _
    // Predicated region
    $region14: #{tpu_custom_call.1} parent=1 // pred_check
      _
    $region15: #{tpu_custom_call.1} parent=1 // pred_check_branch
      %22 = sbr.rel (0) target = $region17
    $region16: #{tpu_custom_call.1} parent=1 // pred_region
      _
    $region17: #{tpu_custom_call.1} parent=1 // pred_fallthru
      _
    // Predicated region
    $region18: #{tpu_custom_call.1} parent=1 // pred_check
      _
    $region19: #{tpu_custom_call.1} parent=1 // pred_check_branch
      %24 = sbr.rel (0) target = $region21
    $region20: #{tpu_custom_call.1} parent=1 // pred_region
      _
    $region21: #{tpu_custom_call.1} parent=1 // pred_fallthru
      _
    // Predicated region
    $region22: #{tpu_custom_call.1} parent=1 // pred_check
      _
    $region23: #{tpu_custom_call.1} parent=1 // pred_check_branch
      %26 = sbr.rel (0) target = $region25
    $region24: #{tpu_custom_call.1} parent=1 // pred_region
      _
    $region25: #{tpu_custom_call.1} parent=1 // pred_fallthru
      _
    // Predicated region
    $region26: #{tpu_custom_call.1} parent=1 // pred_check
      _
    $region27: #{tpu_custom_call.1} parent=1 // pred_check_branch
      %28 = sbr.rel (0) target = $region29
    $region28: #{tpu_custom_call.1} parent=1 // pred_region
      _
    $region29: #{tpu_custom_call.1} parent=1 // pred_fallthru
      _
    // Predicated region
    $region30: #{tpu_custom_call.1} parent=1 // pred_check
      _
    $region31: #{tpu_custom_call.1} parent=1 // pred_check_branch
      %30 = sbr.rel (0) target = $region33
    $region32: #{tpu_custom_call.1} parent=1 // pred_region
      _
    $region33: #{tpu_custom_call.1} parent=1 // pred_fallthru
      _
    // Predicated region
    $region34: #{tpu_custom_call.1} parent=1 // pred_check
      _
    $region35: #{tpu_custom_call.1} parent=1 // pred_check_branch
      %32 = sbr.rel (0) target = $region37
    $region36: #{tpu_custom_call.1} parent=1 // pred_region
      _
    $region37: #{tpu_custom_call.1} parent=1 // pred_fallthru
      _
    %v34 = vld [vmem:[%s0] sm:$0xff]
    %v35 = vld [vmem:[%s0 + $0x8] sm:$0xf]
    %v36 = vld [vmem:[%s0 + $0xc] sm:$0xff]
    %v37 = vld [vmem:[%s0 + $0x14] sm:$0xf]
    %v38 = vld [vmem:[%s1] sm:$0xf]
    %v39 = vld [vmem:[%s1 + $0x4] sm:$0xf]
    %v40 = vld [vmem:[%s1 + $0x8] sm:$0xf]
    %v41 = vld [vmem:[%s1 + $0xc] sm:$0xf]
    %v42 = vld [vmem:[%s1 + $0x10] sm:$0xf]
    %v43 = vld [vmem:[%s1 + $0x14] sm:$0xf]
    %v44 = vld [vmem:[%s1 + $0x18] sm:$0xf]
    %v45 = vld [vmem:[%s1 + $0x1c] sm:$0xf]
    %v46 = vld [vmem:[%s1 + $0x20] sm:$0xf]
    %v47 = vld [vmem:[%s1 + $0x24] sm:$0xf]
    %v48 = vld [vmem:[%s1 + $0x28] sm:$0xf]
    %v49 = vld [vmem:[%s1 + $0x2c] sm:$0xf]
    %v50 = vld [vmem:[%s1 + $0x30] sm:$0xf]
    %v51 = vld [vmem:[%s1 + $0x34] sm:$0xf]
    %v52 = vld [vmem:[%s1 + $0x38] sm:$0xf]
    %v53 = vld [vmem:[%s1 + $0x3c] sm:$0xf]
    %v54 = vld [vmem:[%s1 + $0x40] sm:$0xf]
    %v55 = vld [vmem:[%s1 + $0x44] sm:$0xf]
    %v56 = vld [vmem:[%s1 + $0x48] sm:$0xf]
    %v57 = vld [vmem:[%s1 + $0x4c] sm:$0xf]
    %v58 = vld [vmem:[%s1 + $0x50] sm:$0xf]
    %v59 = vld [vmem:[%s1 + $0x54] sm:$0xf]
    %v60 = vld [vmem:[%s1 + $0x58] sm:$0xf]
    %v61 = vld [vmem:[%s1 + $0x5c] sm:$0xf]
    %v62 = vld [vmem:[%s1 + $0x60] sm:$0xf]
    %v63 = vld [vmem:[%s1 + $0x64] sm:$0xf]
    %v64 = vld [vmem:[%s1 + $0x68] sm:$0xf]
    %v65 = vld [vmem:[%s1 + $0x6c] sm:$0xf]
    %v66 = vld [vmem:[%s1 + $0x70] sm:$0xf]
    %v67 = vld [vmem:[%s1 + $0x74] sm:$0xf]
    %v68 = vld [vmem:[%s1 + $0x78] sm:$0xf]
    %v69 = vld [vmem:[%s1 + $0x7c] sm:$0xf]
    %v70 = vld [vmem:[%s1 + $0x80] sm:$0xf]
    %v71 = vld [vmem:[%s1 + $0x84] sm:$0xf]
    %v72 = vld [vmem:[%s1 + $0x88] sm:$0xf]
    %v73 = vld [vmem:[%s1 + $0x8c] sm:$0xf]
    %v74 = vld [vmem:[%s1 + $0x90] sm:$0xf]
    %v75 = vld [vmem:[%s1 + $0x94] sm:$0xf]
    %v76 = vld [vmem:[%s1 + $0x98] sm:$0xf]
    %v77 = vld [vmem:[%s1 + $0x9c] sm:$0xf]
    %v78 = vld [vmem:[%s1 + $0xa0] sm:$0xf]
    %v79 = vld [vmem:[%s1 + $0xa4] sm:$0xf]
    %v80 = vld [vmem:[%s1 + $0xa8] sm:$0xf]
    %v81 = vld [vmem:[%s1 + $0xac] sm:$0xf]
    %v82 = vld [vmem:[%s1 + $0xb0] sm:$0xf]
    %v83 = vld [vmem:[%s1 + $0xb4] sm:$0xf]
    %v84 = vld [vmem:[%s1 + $0xb8] sm:$0xf]
    %v85 = vld [vmem:[%s1 + $0xbc] sm:$0xf]
    %v86 = vld [vmem:[%s2] sm:$0x1]
    %v88 = vlaneseq
    %v89 = vshrl.u32 %v88, 7
    %v90 = vsub.s32 0, %v89
    %v91 = vrot.slane %v86, %v90
    %v97 = vunpack.c.l.b16 %v34
    %v98 = vunpack.c.h.b16 %v34
    %v99 = vunpack.c.l.b16 %v35
    %v100 = vunpack.c.l.b16 %v36
    %v101 = vunpack.c.h.b16 %v36
    %v102 = vunpack.c.l.b16 %v37
    %v103 = vpack.c.b16 %v100, %v97
    %v104 = vpack.c.b16 %v101, %v98
    %v105 = vpack.c.b16 %v102, %v99
    %v157 = vunpack.c.l.b16 %v38
    %v158 = vunpack.c.l.b16 %v39
    %v159 = vunpack.c.l.b16 %v40
    %v160 = vunpack.c.l.b16 %v41
    %v161 = vunpack.c.l.b16 %v42
    %v162 = vunpack.c.l.b16 %v43
    %v163 = vunpack.c.l.b16 %v44
    %v164 = vunpack.c.l.b16 %v45
    %v165 = vunpack.c.l.b16 %v46
    %v166 = vunpack.c.l.b16 %v47
    %v167 = vunpack.c.l.b16 %v48
    %v168 = vunpack.c.l.b16 %v49
    %v169 = vunpack.c.l.b16 %v50
    %v170 = vunpack.c.l.b16 %v51
    %v171 = vunpack.c.l.b16 %v52
    %v172 = vunpack.c.l.b16 %v53
    %v173 = vunpack.c.l.b16 %v54
    %v174 = vunpack.c.l.b16 %v55
    %v175 = vunpack.c.l.b16 %v56
    %v176 = vunpack.c.l.b16 %v57
    %v177 = vunpack.c.l.b16 %v58
    %v178 = vunpack.c.l.b16 %v59
    %v179 = vunpack.c.l.b16 %v60
    %v180 = vunpack.c.l.b16 %v61
    %v181 = vunpack.c.l.b16 %v62
    %v182 = vunpack.c.l.b16 %v63
    %v183 = vunpack.c.l.b16 %v64
    %v184 = vunpack.c.l.b16 %v65
    %v185 = vunpack.c.l.b16 %v66
    %v186 = vunpack.c.l.b16 %v67
    %v187 = vunpack.c.l.b16 %v68
    %v188 = vunpack.c.l.b16 %v69
    %v189 = vunpack.c.l.b16 %v70
    %v190 = vunpack.c.l.b16 %v71
    %v191 = vunpack.c.l.b16 %v72
    %v192 = vunpack.c.l.b16 %v73
    %v193 = vunpack.c.l.b16 %v74
    %v194 = vunpack.c.l.b16 %v75
    %v195 = vunpack.c.l.b16 %v76
    %v196 = vunpack.c.l.b16 %v77
    %v197 = vunpack.c.l.b16 %v78
    %v198 = vunpack.c.l.b16 %v79
    %v199 = vunpack.c.l.b16 %v80
    %v200 = vunpack.c.l.b16 %v81
    %v201 = vunpack.c.l.b16 %v82
    %v202 = vunpack.c.l.b16 %v83
    %v203 = vunpack.c.l.b16 %v84
    %v204 = vunpack.c.l.b16 %v85
    %v205 = vpack.c.b16 %v158, %v157
    %v206 = vpack.c.b16 %v160, %v159
    %v207 = vpack.c.b16 %v162, %v161
    %v208 = vpack.c.b16 %v164, %v163
    %v209 = vpack.c.b16 %v166, %v165
    %v210 = vpack.c.b16 %v168, %v167
    %v211 = vpack.c.b16 %v170, %v169
    %v212 = vpack.c.b16 %v172, %v171
    %v213 = vpack.c.b16 %v174, %v173
    %v214 = vpack.c.b16 %v176, %v175
    %v215 = vpack.c.b16 %v178, %v177
    %v216 = vpack.c.b16 %v180, %v179
    %v217 = vpack.c.b16 %v182, %v181
    %v218 = vpack.c.b16 %v184, %v183
    %v219 = vpack.c.b16 %v186, %v185
    %v220 = vpack.c.b16 %v188, %v187
    %v221 = vpack.c.b16 %v190, %v189
    %v222 = vpack.c.b16 %v192, %v191
    %v223 = vpack.c.b16 %v194, %v193
    %v224 = vpack.c.b16 %v196, %v195
    %v225 = vpack.c.b16 %v198, %v197
    %v226 = vpack.c.b16 %v200, %v199
    %v227 = vpack.c.b16 %v202, %v201
    %v228 = vpack.c.b16 %v204, %v203
    %253 = vmatprep.subr.bf16.mxu0 0
    %254 = vmatpush1.bf16.msra.mxu0 %v205
    %255 = vmatprep.subr.bf16.mxu0 0
    %256 = vmatpush1.bf16.msra.mxu0 %v206
    %257 = vmatprep.subr.bf16.mxu0 0
    %258 = vmatpush1.bf16.msra.mxu0 %v207
    %259 = vmatprep.subr.bf16.mxu0 0
    %260 = vmatpush1.bf16.msra.mxu0 %v208
    %261 = vmatprep.subr.bf16.mxu0 0
    %262 = vmatpush1.bf16.msra.mxu0 %v209
    %263 = vmatprep.subr.bf16.mxu0 0
    %264 = vmatpush1.bf16.msra.mxu0 %v210
    %265 = vmatprep.subr.bf16.mxu0 0
    %266 = vmatpush1.bf16.msra.mxu0 %v211
    %267 = vmatprep.subr.bf16.mxu0 0
    %268 = vmatpush1.bf16.msra.mxu0 %v212
    %269 = vmatprep.subr.bf16.mxu0 0
    %270 = vmatpush1.bf16.msra.mxu0 %v213
    %271 = vmatprep.subr.bf16.mxu0 0
    %272 = vmatpush1.bf16.msra.mxu0 %v214
    %273 = vmatprep.subr.bf16.mxu0 0
    %274 = vmatpush1.bf16.msra.mxu0 %v215
    %275 = vmatprep.subr.bf16.mxu0 0
    %276 = vmatpush1.bf16.msra.mxu0 %v216
    %277 = vmatprep.subr.bf16.mxu0 0
    %278 = vmatpush1.bf16.msra.mxu0 %v217
    %279 = vmatprep.subr.bf16.mxu0 0
    %280 = vmatpush1.bf16.msra.mxu0 %v218
    %281 = vmatprep.subr.bf16.mxu0 0
    %282 = vmatpush1.bf16.msra.mxu0 %v219
    %283 = vmatprep.subr.bf16.mxu0 0
    %284 = vmatpush1.bf16.msra.mxu0 %v220
    %285 = vmatprep.mubr.bf16.mxu0 %v104
    %286 = vmatmul.mubr.bf16.gmra.mrb[0].mxu0 %v103
    %v287 = vpop.f32.mrb[0].mxu0
    %v288 = vadd.f32 %v91, %v287
    %v289 = vpop.f32.mrb[0].mxu0
    %v290 = vpop.f32.mrb[0].mxu0
    %v291 = vadd.f32 %v91, %v290
    %v292 = vpop.f32.mrb[0].mxu0
    %293 = vdwg.mxu0
    %294 = vmatprep.subr.bf16.mxu0 0
    %295 = vmatpush1.bf16.msra.mxu0 %v221
    %296 = vmatprep.subr.bf16.mxu0 0
    %297 = vmatpush1.bf16.msra.mxu0 %v222
    %298 = vmatprep.subr.bf16.mxu0 0
    %299 = vmatpush1.bf16.msra.mxu0 %v223
    %300 = vmatprep.subr.bf16.mxu0 0
    %301 = vmatpush1.bf16.msra.mxu0 %v224
    %302 = vmatprep.subr.bf16.mxu0 0
    %303 = vmatpush1.bf16.msra.mxu0 %v225
    %304 = vmatprep.subr.bf16.mxu0 0
    %305 = vmatpush1.bf16.msra.mxu0 %v226
    %306 = vmatprep.subr.bf16.mxu0 0
    %307 = vmatpush1.bf16.msra.mxu0 %v227
    %308 = vmatprep.subr.bf16.mxu0 0
    %309 = vmatpush1.bf16.msra.mxu0 %v228
    %310 = vmatprep.subr.bf16.mxu0 0
    %311 = vmatpush1.bf16.msra.mxu0 0
    %312 = vmatprep.subr.bf16.mxu0 0
    %313 = vmatpush1.bf16.msra.mxu0 0
    %314 = vmatprep.subr.bf16.mxu0 0
    %315 = vmatpush1.bf16.msra.mxu0 0
    %316 = vmatprep.subr.bf16.mxu0 0
    %317 = vmatpush1.bf16.msra.mxu0 0
    %318 = vmatprep.subr.bf16.mxu0 0
    %319 = vmatpush1.bf16.msra.mxu0 0
    %320 = vmatprep.subr.bf16.mxu0 0
    %321 = vmatpush1.bf16.msra.mxu0 0
    %322 = vmatprep.subr.bf16.mxu0 0
    %323 = vmatpush1.bf16.msra.mxu0 0
    %324 = vmatprep.subr.bf16.mxu0 0
    %325 = vmatpush1.bf16.msra.mxu0 0
    %326 = vmatprep.mubr.bf16.mxu0 0
    %327 = vmatmul.mubr.bf16.gmra.mrb[0].mxu0 %v105
    %v328 = vpop.f32.mrb[0].mxu0
    %v329 = vadd.f32 %v288, %v328
    %v330 = vpop.f32.mrb[0].mxu0
    %v331 = vpop.f32.mrb[0].mxu0
    %v332 = vadd.f32 %v291, %v331
    %v333 = vpop.f32.mrb[0].mxu0
    %334 = vdwg.mxu0
    %vm335 = vcmp.gt.f32.partialorder %v329, 0.0
    %vm336 = vcmp.gt.f32.partialorder %v332, 0.0
    %v337 = vmul.f32 %v329, 0.2
    %v338 = vmul.f32 %v332, 0.2
    %v339 = vsel %vm335, %v329, %v337
    %v340 = vsel %vm336, %v332, %v338
    %v341 = vld [vmem:[%s3] sm:$0xff]
    %v342 = vld [vmem:[%s3 + $0x8] sm:$0xff]
    %v343 = vld [vmem:[%s3 + $0x10] sm:$0xff]
    %v344 = vld [vmem:[%s3 + $0x18] sm:$0xff]
    %v345 = vld [vmem:[%s4] sm:$0x1]
    %v347 = vlaneseq
    %v348 = vshrl.u32 %v347, 7
    %v349 = vsub.s32 0, %v348
    %v350 = vrot.slane %v345, %v349
    %vm352 = vcmask 261120
    %v354 = vsel %vm352, %v339, 0
    %v357 = vsel %vm352, %v340, 0
    %359 = vmatprep.subr.mxu0 0.0
    %360 = vmatpush1.msra.mxu0 %v341
    %361 = vmatprep.subr.mxu0 0.0
    %362 = vmatpush1.msra.mxu0 %v342
    %363 = vmatprep.subr.mxu0 0.0
    %364 = vmatpush1.msra.mxu0 %v343
    %365 = vmatprep.subr.mxu0 0.0
    %366 = vmatpush1.msra.mxu0 %v344
    %367 = vmatprep.subr.mxu0 0.0
    %368 = vmatpush1.msra.mxu0 0.0
    %369 = vmatprep.subr.mxu0 0.0
    %370 = vmatpush1.msra.mxu0 0.0
    %371 = vmatprep.subr.mxu0 0.0
    %372 = vmatpush1.msra.mxu0 0.0
    %373 = vmatprep.subr.mxu0 0.0
    %374 = vmatpush1.msra.mxu0 0.0
    %375 = vmatprep.subr.mxu0 0.0
    %376 = vmatpush1.msra.mxu0 0.0
    %377 = vmatprep.subr.mxu0 0.0
    %378 = vmatpush1.msra.mxu0 0.0
    %379 = vmatprep.subr.mxu0 0.0
    %380 = vmatpush1.msra.mxu0 0.0
    %381 = vmatprep.subr.mxu0 0.0
    %382 = vmatpush1.msra.mxu0 0.0
    %383 = vmatprep.subr.mxu0 0.0
    %384 = vmatpush1.msra.mxu0 0.0
    %385 = vmatprep.subr.mxu0 0.0
    %386 = vmatpush1.msra.mxu0 0.0
    %387 = vmatprep.subr.mxu0 0.0
    %388 = vmatpush1.msra.mxu0 0.0
    %389 = vmatprep.subr.mxu0 0.0
    %390 = vmatpush1.msra.mxu0 0.0
    %391 = vmatprep.subr.mxu0 0.0
    %392 = vmatpush1.msra.mxu0 0.0
    %393 = vmatprep.subr.mxu0 0.0
    %394 = vmatpush1.msra.mxu0 0.0
    %395 = vmatprep.subr.mxu0 0.0
    %396 = vmatpush1.msra.mxu0 0.0
    %397 = vmatprep.subr.mxu0 0.0
    %398 = vmatpush1.msra.mxu0 0.0
    %399 = vmatprep.subr.mxu0 0.0
    %400 = vmatpush1.msra.mxu0 0.0
    %401 = vmatprep.subr.mxu0 0.0
    %402 = vmatpush1.msra.mxu0 0.0
    %403 = vmatprep.subr.mxu0 0.0
    %404 = vmatpush1.msra.mxu0 0.0
    %405 = vmatprep.subr.mxu0 0.0
    %406 = vmatpush1.msra.mxu0 0.0
    %407 = vmatprep.subr.mxu0 0.0
    %408 = vmatpush1.msra.mxu0 0.0
    %409 = vmatprep.subr.mxu0 0.0
    %410 = vmatpush1.msra.mxu0 0.0
    %411 = vmatprep.subr.mxu0 0.0
    %412 = vmatpush1.msra.mxu0 0.0
    %413 = vmatprep.subr.mxu0 0.0
    %414 = vmatpush1.msra.mxu0 0.0
    %415 = vmatprep.subr.mxu0 0.0
    %416 = vmatpush1.msra.mxu0 0.0
    %417 = vmatprep.subr.mxu0 0.0
    %418 = vmatpush1.msra.mxu0 0.0
    %419 = vmatprep.subr.mxu0 0.0
    %420 = vmatpush1.msra.mxu0 0.0
    %421 = vmatprep.subr.mxu0 0.0
    %422 = vmatpush1.msra.mxu0 0.0
    %423 = vmatprep.mubr.f32.mxu0 0.0
    %424 = vmatmul.mubr.f32.gmra.mrb[0].mxu0 %v354
    %v425 = vpop.f32.mrb[0].mxu0
    %v426 = vadd.f32 %v350, %v425
    %v427 = vpop.f32.mrb[0].mxu0
    %428 = vmatprep.mubr.f32.mxu0 0.0
    %429 = vmatmul.mubr.f32.gmra.mrb[0].mxu0 %v357
    %v430 = vpop.f32.mrb[0].mxu0
    %v431 = vadd.f32 %v350, %v430
    %v432 = vpop.f32.mrb[0].mxu0
    %433 = vdwg.mxu0
    %vm434 = vcmp.gt.f32.partialorder %v426, 0.0
    %vm435 = vcmp.gt.f32.partialorder %v431, 0.0
    %v436 = vmul.f32 %v426, 0.2
    %v437 = vmul.f32 %v431, 0.2
    %v438 = vsel %vm434, %v426, %v436
    %v439 = vsel %vm435, %v431, %v437
    %vm440 = vcmask 64512
    %v441 = vsel %vm440, %v438, 0.0
    %v442 = vrot.slane %v441, 4
    %v443 = vadd.f32 %v441, %v442
    %v444 = vrot.slane %v443, 2
    %v445 = vadd.f32 %v443, %v444
    %v446 = vrot.slane %v445, 1
    %v447 = vadd.f32 %v445, %v446
    %v448 = vsel %vm440, %v439, 0.0
    %v449 = vrot.slane %v448, 4
    %v450 = vadd.f32 %v448, %v449
    %v451 = vrot.slane %v450, 2
    %v452 = vadd.f32 %v450, %v451
    %v453 = vrot.slane %v452, 1
    %v454 = vadd.f32 %v452, %v453
    %v455 = vmul.f32 %v447, 0.125
    %v456 = vmul.f32 %v454, 0.125
    %v457 = vld [vmem:[%s5] sm:$0xff]
    %v458 = vld [vmem:[%s6] sm:$0x1]
    %v460 = vlaneseq
    %v461 = vshrl.u32 %v460, 7
    %v462 = vsub.s32 0, %v461
    %v463 = vrot.slane %v458, %v462
    %vm467 = vcmask 1041409
    %v468 = vsel %vm467, %v456, %v455
    %v469 = vsel %vm440, %v468, 0
    %471 = vmatprep.subr.mxu0 0.0
    %472 = vmatpush1.msra.mxu0 %v457
    %473 = vmatprep.subr.mxu0 0.0
    %474 = vmatpush1.msra.mxu0 0.0
    %475 = vmatprep.subr.mxu0 0.0
    %476 = vmatpush1.msra.mxu0 0.0
    %477 = vmatprep.subr.mxu0 0.0
    %478 = vmatpush1.msra.mxu0 0.0
    %479 = vmatprep.subr.mxu0 0.0
    %480 = vmatpush1.msra.mxu0 0.0
    %481 = vmatprep.subr.mxu0 0.0
    %482 = vmatpush1.msra.mxu0 0.0
    %483 = vmatprep.subr.mxu0 0.0
    %484 = vmatpush1.msra.mxu0 0.0
    %485 = vmatprep.subr.mxu0 0.0
    %486 = vmatpush1.msra.mxu0 0.0
    %487 = vmatprep.subr.mxu0 0.0
    %488 = vmatpush1.msra.mxu0 0.0
    %489 = vmatprep.subr.mxu0 0.0
    %490 = vmatpush1.msra.mxu0 0.0
    %491 = vmatprep.subr.mxu0 0.0
    %492 = vmatpush1.msra.mxu0 0.0
    %493 = vmatprep.subr.mxu0 0.0
    %494 = vmatpush1.msra.mxu0 0.0
    %495 = vmatprep.subr.mxu0 0.0
    %496 = vmatpush1.msra.mxu0 0.0
    %497 = vmatprep.subr.mxu0 0.0
    %498 = vmatpush1.msra.mxu0 0.0
    %499 = vmatprep.subr.mxu0 0.0
    %500 = vmatpush1.msra.mxu0 0.0
    %501 = vmatprep.subr.mxu0 0.0
    %502 = vmatpush1.msra.mxu0 0.0
    %503 = vmatprep.subr.mxu0 0.0
    %504 = vmatpush1.msra.mxu0 0.0
    %505 = vmatprep.subr.mxu0 0.0
    %506 = vmatpush1.msra.mxu0 0.0
    %507 = vmatprep.subr.mxu0 0.0
    %508 = vmatpush1.msra.mxu0 0.0
    %509 = vmatprep.subr.mxu0 0.0
    %510 = vmatpush1.msra.mxu0 0.0
    %511 = vmatprep.subr.mxu0 0.0
    %512 = vmatpush1.msra.mxu0 0.0
    %513 = vmatprep.subr.mxu0 0.0
    %514 = vmatpush1.msra.mxu0 0.0
    %515 = vmatprep.subr.mxu0 0.0
    %516 = vmatpush1.msra.mxu0 0.0
    %517 = vmatprep.subr.mxu0 0.0
    %518 = vmatpush1.msra.mxu0 0.0
    %519 = vmatprep.subr.mxu0 0.0
    %520 = vmatpush1.msra.mxu0 0.0
    %521 = vmatprep.subr.mxu0 0.0
    %522 = vmatpush1.msra.mxu0 0.0
    %523 = vmatprep.subr.mxu0 0.0
    %524 = vmatpush1.msra.mxu0 0.0
    %525 = vmatprep.subr.mxu0 0.0
    %526 = vmatpush1.msra.mxu0 0.0
    %527 = vmatprep.subr.mxu0 0.0
    %528 = vmatpush1.msra.mxu0 0.0
    %529 = vmatprep.subr.mxu0 0.0
    %530 = vmatpush1.msra.mxu0 0.0
    %531 = vmatprep.subr.mxu0 0.0
    %532 = vmatpush1.msra.mxu0 0.0
    %533 = vmatprep.subr.mxu0 0.0
    %534 = vmatpush1.msra.mxu0 0.0
    %535 = vmatprep.mubr.f32.mxu0 0.0
    %536 = vmatmul.mubr.f32.gmra.mrb[0].mxu0 %v469
    %v537 = vpop.f32.mrb[0].mxu0
    %v538 = vadd.f32 %v463, %v537
    %v539 = vpop.f32.mrb[0].mxu0
    %540 = vdwg.mxu0
    %vm541 = vcmp.gt.f32.partialorder %v538, 0.0
    %v542 = vmul.f32 %v538, 0.2
    %v543 = vsel %vm541, %v538, %v542
    %v544 = vld [vmem:[%s7] sm:$0xff]
    %v545 = vld [vmem:[%s8] sm:$0x1]
    %v547 = vlaneseq
    %v548 = vshrl.u32 %v547, 7
    %v549 = vsub.s32 0, %v548
    %v550 = vrot.slane %v545, %v549
    %v553 = vsel %vm440, %v543, 0
    %555 = vmatprep.subr.mxu0 0.0
    %556 = vmatpush1.msra.mxu0 %v544
    %557 = vmatprep.subr.mxu0 0.0
    %558 = vmatpush1.msra.mxu0 0.0
    %559 = vmatprep.subr.mxu0 0.0
    %560 = vmatpush1.msra.mxu0 0.0
    %561 = vmatprep.subr.mxu0 0.0
    %562 = vmatpush1.msra.mxu0 0.0
    %563 = vmatprep.subr.mxu0 0.0
    %564 = vmatpush1.msra.mxu0 0.0
    %565 = vmatprep.subr.mxu0 0.0
    %566 = vmatpush1.msra.mxu0 0.0
    %567 = vmatprep.subr.mxu0 0.0
    %568 = vmatpush1.msra.mxu0 0.0
    %569 = vmatprep.subr.mxu0 0.0
    %570 = vmatpush1.msra.mxu0 0.0
    %571 = vmatprep.subr.mxu0 0.0
    %572 = vmatpush1.msra.mxu0 0.0
    %573 = vmatprep.subr.mxu0 0.0
    %574 = vmatpush1.msra.mxu0 0.0
    %575 = vmatprep.subr.mxu0 0.0
    %576 = vmatpush1.msra.mxu0 0.0
    %577 = vmatprep.subr.mxu0 0.0
    %578 = vmatpush1.msra.mxu0 0.0
    %579 = vmatprep.subr.mxu0 0.0
    %580 = vmatpush1.msra.mxu0 0.0
    %581 = vmatprep.subr.mxu0 0.0
    %582 = vmatpush1.msra.mxu0 0.0
    %583 = vmatprep.subr.mxu0 0.0
    %584 = vmatpush1.msra.mxu0 0.0
    %585 = vmatprep.subr.mxu0 0.0
    %586 = vmatpush1.msra.mxu0 0.0
    %587 = vmatprep.subr.mxu0 0.0
    %588 = vmatpush1.msra.mxu0 0.0
    %589 = vmatprep.subr.mxu0 0.0
    %590 = vmatpush1.msra.mxu0 0.0
    %591 = vmatprep.subr.mxu0 0.0
    %592 = vmatpush1.msra.mxu0 0.0
    %593 = vmatprep.subr.mxu0 0.0
    %594 = vmatpush1.msra.mxu0 0.0
    %595 = vmatprep.subr.mxu0 0.0
    %596 = vmatpush1.msra.mxu0 0.0
    %597 = vmatprep.subr.mxu0 0.0
    %598 = vmatpush1.msra.mxu0 0.0
    %599 = vmatprep.subr.mxu0 0.0
    %600 = vmatpush1.msra.mxu0 0.0
    %601 = vmatprep.subr.mxu0 0.0
    %602 = vmatpush1.msra.mxu0 0.0
    %603 = vmatprep.subr.mxu0 0.0
    %604 = vmatpush1.msra.mxu0 0.0
    %605 = vmatprep.subr.mxu0 0.0
    %606 = vmatpush1.msra.mxu0 0.0
    %607 = vmatprep.subr.mxu0 0.0
    %608 = vmatpush1.msra.mxu0 0.0
    %609 = vmatprep.subr.mxu0 0.0
    %610 = vmatpush1.msra.mxu0 0.0
    %611 = vmatprep.subr.mxu0 0.0
    %612 = vmatpush1.msra.mxu0 0.0
    %613 = vmatprep.subr.mxu0 0.0
    %614 = vmatpush1.msra.mxu0 0.0
    %615 = vmatprep.subr.mxu0 0.0
    %616 = vmatpush1.msra.mxu0 0.0
    %617 = vmatprep.subr.mxu0 0.0
    %618 = vmatpush1.msra.mxu0 0.0
    %619 = vmatprep.mubr.f32.mxu0 0.0
    %620 = vmatmul.mubr.f32.gmra.mrb[0].mxu0 %v553
    %v621 = vpop.f32.mrb[0].mxu0
    %v622 = vadd.f32 %v550, %v621
    %v623 = vpop.f32.mrb[0].mxu0
    %624 = vdwg.mxu0
    %vm625 = vcmask 9216
    %626 = vst.msk [vmem:[#allocation2] sm:$0x3] %vm625, %v622
    // Predicated region
    $region38: #{tpu_custom_call.1} parent=1 // pred_check
      _
    $region39: #{tpu_custom_call.1} parent=1 // pred_check_branch
      %628 = sbr.rel (0) target = $region41
    $region40: #{tpu_custom_call.1} parent=1 // pred_region
      %s630 = ssub.s32 32, 32
      %631 = vsyncadd [#allocation3], %s630
      %s633 = sshll.u32 [#allocation2], 4
      %s634 = int_to_ptr.vmem [resolvable:$true] %s633
      %636 = dma.vmem_to_hbm [thread:$0]  %s634, 32, %s9, [#allocation3]
    $region41: #{tpu_custom_call.1} parent=1 // pred_fallthru
      _
    // Predicated region
    $region42: #{tpu_custom_call.1} parent=1 // pred_check
      _
    $region43: #{tpu_custom_call.1} parent=1 // pred_check_branch
      %638 = sbr.rel (0) target = $region45
    $region44: #{tpu_custom_call.1} parent=1 // pred_region
      %639 = dma.done [#allocation3], 32
    $region45: #{tpu_custom_call.1} parent=1 // pred_fallthru
      _
    %640 = vsyncpa [#allocation3], 1

</llo_original>
